<compile_context>
chip_gen: v7x
topology: tpu7x:2x2x1
jax: 0.10.0
libtpu: 0.0.40
codegen_flags: <defaults>
</compile_context>

<pallas_src>
import functools

import jax
import jax.numpy as jnp
from jax.experimental import pallas as pl
from jax.experimental.pallas import tpu as pltpu

LN_EPS = 1e-5  # PyTorch nn.LayerNorm default


def _cdiv(a, b):
    return -(-a // b)


def _round_up(x, m):
    return _cdiv(x, m) * m


def _layer_norm(x, gamma, beta):
    # One-pass variance (E[x^2] - mu^2) with a clamp against tiny negative
    # values from cancellation.  Slightly different rounding than PyTorch's
    # two-pass LN but well within f32 tolerance at these feature widths.
    mu = jnp.mean(x, axis=-1, keepdims=True)
    var = jnp.maximum(jnp.mean(x * x, axis=-1, keepdims=True) - mu * mu, 0.0)
    inv = jax.lax.rsqrt(var + LN_EPS)
    return (x - mu) * inv * gamma + beta


def critic_kernel(state_ref, action_ref, wbd_ref, w2_ref, p1_ref, p2_ref,
                  q_ref, *, compute_dtype, fc1_dim, fc2_dim, w3_off):
    """One batch tile: fused fc1+fc3 matmul, fc2, LN, relu, fc4 reduce."""
    # Packed per-layer vectors (static sublane slices -> zero-cost views).
    p1 = p1_ref[...]                       # (3, fc1): b1, g1, be1
    p2 = p2_ref[...]                       # (6, fc2): b2, g2, be2, b3, w4, b4
    b1, g1, be1 = p1[0:1, :], p1[1:2, :], p1[2:3, :]
    b2, g2, be2 = p2[0:1, :], p2[1:2, :], p2[2:3, :]
    b3 = p2[3:4, :]
    w4_row = p2[4:5, :]
    b4 = p2[5:6, 0:1]

    # fc1 + fc3 fused: one MXU matmul of [state | action] against the
    # block-diagonal weight.  w3 lives at lane-aligned column offset w3_off,
    # so both slices below are cheap.
    sa = jnp.concatenate([state_ref[...].astype(jnp.float32),
                          action_ref[...].astype(jnp.float32)], axis=-1)
    fused = jnp.dot(sa.astype(compute_dtype), wbd_ref[...],
                    preferred_element_type=jnp.float32)
    h1 = fused[:, :fc1_dim] + b1                       # fc1(state)
    x_a = fused[:, w3_off:w3_off + fc2_dim] + b3       # fc3(action)

    # ln1 -> relu
    h1 = jnp.maximum(_layer_norm(h1, g1, be1), 0.0)

    # fc2 -> ln2 (no relu here)
    x_s = jnp.dot(h1.astype(compute_dtype), w2_ref[...],
                  preferred_element_type=jnp.float32) + b2
    x_s = _layer_norm(x_s, g2, be2)

    # combine + relu
    x = jnp.maximum(x_s + x_a, 0.0)

    # fc4: single output column -> VPU multiply + XLU lane reduce (skip MXU),
    # then transpose to a lane-dense (1, tb) row for an unmasked store.
    q = jnp.sum(x * w4_row, axis=-1, keepdims=True) + b4       # (tb, 1)
    q_ref[...] = jnp.transpose(q).astype(q_ref.dtype)          # (1, tb)


def critic_forward(state, action, params, *, tile_batch=1024, use_bf16=True):
    """state: [B, state_dim], action: [B, action_dim] -> q: [B, 1] float32."""
    (w1, b1, g1, be1, w2, b2, g2, be2, w3, b3, w4, b4) = params
    state = jnp.asarray(state)
    action = jnp.asarray(action)

    B, state_dim = state.shape
    action_dim = action.shape[1]
    fc1_dim = w1.shape[1]
    fc2_dim = w2.shape[1]

    compute_dtype = jnp.bfloat16 if use_bf16 else jnp.float32

    # --- pack the fused fc1+fc3 block-diagonal weight (tiny; in a training
    #     loop this would be pre-packed once per parameter update) ---
    w3_off = _round_up(max(fc1_dim, 1), 128)       # lane-aligned column for w3
    n_fused = w3_off + fc2_dim
    k_in = state_dim + action_dim
    wbd = jnp.zeros((k_in, n_fused), jnp.float32)
    wbd = wbd.at[:state_dim, :fc1_dim].set(w1.astype(jnp.float32))
    wbd = wbd.at[state_dim:, w3_off:].set(w3.astype(jnp.float32))
    wbd = wbd.astype(compute_dtype)
    w2c = w2.astype(compute_dtype)

    # --- pack the small per-layer vectors so the kernel takes 6 inputs ---
    p1 = jnp.concatenate(
        [b1.reshape(1, fc1_dim), g1.reshape(1, fc1_dim),
         be1.reshape(1, fc1_dim)], axis=0).astype(jnp.float32)      # (3, fc1)
    p2 = jnp.concatenate(
        [b2.reshape(1, fc2_dim), g2.reshape(1, fc2_dim),
         be2.reshape(1, fc2_dim), b3.reshape(1, fc2_dim),
         w4.reshape(1, fc2_dim),
         jnp.broadcast_to(jnp.reshape(b4, (1, 1)), (1, fc2_dim))],
        axis=0).astype(jnp.float32)                                 # (6, fc2)

    # --- batch tiling: NO wrapper-side padding.  The ragged last block reads
    #     garbage rows (row-local ops only) whose q lanes are sliced off. ---
    tb_req = max(128, (int(tile_batch) // 128) * 128)
    if B <= 128:
        tb = _round_up(max(B, 8), 8)               # one tiny block
    elif B <= tb_req:
        # Fits in one requested tile: still split into two 128-multiple
        # blocks so both v7x TensorCores get work (no-op on v5e/v6e).
        tb = _round_up(_cdiv(B, 2), 128)
    else:
        tb = tb_req
    num_blocks = _cdiv(B, tb)
    b_total = num_blocks * tb

    in_item = state.dtype.itemsize
    w_item = jnp.dtype(compute_dtype).itemsize
    flops = 2 * b_total * (k_in * n_fused + fc1_dim * fc2_dim + fc2_dim)
    bytes_accessed = ((wbd.size + w2c.size) * w_item
                      + (p1.size + p2.size) * 4
                      + b_total * ((state_dim + action_dim) * in_item + 4))

    # VMEM budget: double-buffered tiles + resident weights + live
    # intermediates, with headroom; never below 8 MiB, never above 64 MiB.
    tile_bytes = 2 * tb * ((state_dim + action_dim) * in_item + 4)
    weight_bytes = 2 * ((wbd.size + w2c.size) * w_item + (p1.size + p2.size) * 4)
    interm_bytes = tb * (n_fused + fc1_dim + 4 * fc2_dim) * 4
    vmem_limit = int(min(64 * 1024 * 1024,
                         max(8 * 1024 * 1024,
                             2 * (tile_bytes + weight_bytes + interm_bytes))))

    kernel = functools.partial(critic_kernel, compute_dtype=compute_dtype,
                               fc1_dim=fc1_dim, fc2_dim=fc2_dim, w3_off=w3_off)

    q_row = pl.pallas_call(
        kernel,
        out_shape=jax.ShapeDtypeStruct((1, b_total), jnp.float32),
        grid=(num_blocks,),
        in_specs=[
            pl.BlockSpec((tb, state_dim), lambda i: (i, 0)),        # state tile
            pl.BlockSpec((tb, action_dim), lambda i: (i, 0)),       # action tile
            pl.BlockSpec((k_in, n_fused), lambda i: (0, 0)),        # fused w1/w3 (resident)
            pl.BlockSpec((fc1_dim, fc2_dim), lambda i: (0, 0)),     # w2 (resident)
            pl.BlockSpec((3, fc1_dim), lambda i: (0, 0)),           # packed fc1 params
            pl.BlockSpec((6, fc2_dim), lambda i: (0, 0)),           # packed fc2 params
        ],
        out_specs=pl.BlockSpec((1, tb), lambda i: (0, i)),          # lane-dense q row
        compiler_params=pltpu.CompilerParams(
            dimension_semantics=("parallel",),
            vmem_limit_bytes=vmem_limit,
        ),
        cost_estimate=pl.CostEstimate(
            flops=int(flops),
            transcendentals=int(2 * b_total),
            bytes_accessed=int(bytes_accessed),
        ),
    )(state, action, wbd, w2c, p1, p2)

    return q_row[0, :B].reshape(B, 1)


def init_critic_params(key, state_dim, action_dim, fc1_dim, fc2_dim):
    """Matches weight_init: xavier_normal weights, zero biases; LayerNorm
    gamma=1, beta=0.  Weights stored as [in, out]."""
    def xavier_normal(k, fan_in, fan_out):
        std = (2.0 / (fan_in + fan_out)) ** 0.5
        return jax.random.normal(k, (fan_in, fan_out), jnp.float32) * std

    k1, k2, k3, k4 = jax.random.split(key, 4)
    w1 = xavier_normal(k1, state_dim, fc1_dim)
    b1 = jnp.zeros((1, fc1_dim), jnp.float32)
    g1 = jnp.ones((1, fc1_dim), jnp.float32)
    be1 = jnp.zeros((1, fc1_dim), jnp.float32)

    w2 = xavier_normal(k2, fc1_dim, fc2_dim)
    b2 = jnp.zeros((1, fc2_dim), jnp.float32)
    g2 = jnp.ones((1, fc2_dim), jnp.float32)
    be2 = jnp.zeros((1, fc2_dim), jnp.float32)

    w3 = xavier_normal(k3, action_dim, fc2_dim)
    b3 = jnp.zeros((1, fc2_dim), jnp.float32)

    w4 = xavier_normal(k4, fc2_dim, 1)
    b4 = jnp.zeros((1, 1), jnp.float32)

    return (w1, b1, g1, be1, w2, b2, g2, be2, w3, b3, w4, b4)


def critic_reference(state, action, params, *, use_bf16=True):
    """Pure-JAX reference with the same dtype policy as the kernel."""
    (w1, b1, g1, be1, w2, b2, g2, be2, w3, b3, w4, b4) = params
    cd = jnp.bfloat16 if use_bf16 else jnp.float32
    prec = jax.lax.Precision.HIGHEST
    h1 = jnp.dot(state.astype(cd), w1.astype(cd),
                 preferred_element_type=jnp.float32, precision=prec) + b1
    h1 = jnp.maximum(_layer_norm(h1, g1, be1), 0.0)
    x_s = jnp.dot(h1.astype(cd), w2.astype(cd),
                  preferred_element_type=jnp.float32, precision=prec) + b2
    x_s = _layer_norm(x_s, g2, be2)
    x_a = jnp.dot(action.astype(cd), w3.astype(cd),
                  preferred_element_type=jnp.float32, precision=prec) + b3
    x = jnp.maximum(x_s + x_a, 0.0)
    return (x @ w4 + b4).astype(jnp.float32)


if __name__ == "__main__":
    # Small shapes consistent with Critic(state_dim, action_dim, fc1_dim, fc2_dim)
    batch, state_dim, action_dim, fc1_dim, fc2_dim = 8, 16, 8, 64, 32

    key = jax.random.PRNGKey(0)
    kp, ks, ka = jax.random.split(key, 3)
    params = init_critic_params(kp, state_dim, action_dim, fc1_dim, fc2_dim)
    state = jax.random.normal(ks, (batch, state_dim), jnp.float32)
    action = jax.random.normal(ka, (batch, action_dim), jnp.float32)

    # 1) f32 path, single tiny block (lane-dense (1, 8) output row).
    q = critic_forward(state, action, params, use_bf16=False)
    q = jax.block_until_ready(q)
    q_ref = critic_reference(state, action, params, use_bf16=False)
    assert q.shape == (batch, 1)
    assert jnp.allclose(q, q_ref, atol=1e-2, rtol=1e-2), "f32 mismatch vs reference"

    # 2) bf16-matmul path, 2 blocks of 256 rows with a ragged last block
    #    (300 rows; OOB rows in the last block are garbage but row-local and
    #    sliced off in the wrapper -- no input padding is performed).
    batch2 = 300
    ks2, ka2 = jax.random.split(jax.random.PRNGKey(1), 2)
    state2 = jax.random.normal(ks2, (batch2, state_dim), jnp.float32)
    action2 = jax.random.normal(ka2, (batch2, action_dim), jnp.float32)
    q2 = critic_forward(state2, action2, params, tile_batch=1024, use_bf16=True)
    q2 = jax.block_until_ready(q2)
    q2_ref = critic_reference(state2, action2, params, use_bf16=True)
    assert q2.shape == (batch2, 1)
    assert jnp.allclose(q2, q2_ref, atol=5e-3, rtol=5e-3), "bf16 mismatch vs reference"

    print("KERNEL_OK")
</pallas_src>

<mosaic_0001>
module attributes {stable_mosaic.version = 11 : i64} {
  func.func @critic_kernel(%arg0: i32, %arg1: memref<8x16xf32, #tpu.memory_space<vmem>>, %arg2: memref<8x8xf32, #tpu.memory_space<vmem>>, %arg3: memref<24x160xf32, #tpu.memory_space<vmem>>, %arg4: memref<64x32xf32, #tpu.memory_space<vmem>>, %arg5: memref<3x64xf32, #tpu.memory_space<vmem>>, %arg6: memref<6x32xf32, #tpu.memory_space<vmem>>, %arg7: memref<1x8xf32, #tpu.memory_space<vmem>>) attributes {dimension_semantics = [#tpu.dimension_semantics<parallel>], iteration_bounds = array<i64: 1>, scalar_prefetch = 0 : i64, scratch_operands = 0 : i64, tpu.core_type = #tpu.core_type<tc>, window_params = [{transform_indices = @transform_0, window_bounds = array<i64: 8, 16>}, {transform_indices = @transform_1, window_bounds = array<i64: 8, 8>}, {pipeline_mode = #tpu.pipeline_mode<synchronous>, transform_indices = @transform_2, window_bounds = array<i64: 24, 160>}, {pipeline_mode = #tpu.pipeline_mode<synchronous>, transform_indices = @transform_3, window_bounds = array<i64: 64, 32>}, {pipeline_mode = #tpu.pipeline_mode<synchronous>, transform_indices = @transform_4, window_bounds = array<i64: 3, 64>}, {pipeline_mode = #tpu.pipeline_mode<synchronous>, transform_indices = @transform_5, window_bounds = array<i64: 6, 32>}, {transform_indices = @transform_6, window_bounds = array<i64: 1, 8>}]} {
    %c0 = arith.constant 0 : index
    %c0_0 = arith.constant 0 : index
    %0 = vector.load %arg5[%c0, %c0_0] : memref<3x64xf32, #tpu.memory_space<vmem>>, vector<3x64xf32>
    %c0_1 = arith.constant 0 : index
    %c0_2 = arith.constant 0 : index
    %1 = vector.load %arg6[%c0_1, %c0_2] : memref<6x32xf32, #tpu.memory_space<vmem>>, vector<6x32xf32>
    %2 = vector.extract_strided_slice %0 {offsets = [0, 0], sizes = [1, 64], strides = [1, 1]} : vector<3x64xf32> to vector<1x64xf32>
    %3 = vector.extract_strided_slice %0 {offsets = [1, 0], sizes = [1, 64], strides = [1, 1]} : vector<3x64xf32> to vector<1x64xf32>
    %4 = vector.extract_strided_slice %0 {offsets = [2, 0], sizes = [1, 64], strides = [1, 1]} : vector<3x64xf32> to vector<1x64xf32>
    %5 = vector.extract_strided_slice %1 {offsets = [0, 0], sizes = [1, 32], strides = [1, 1]} : vector<6x32xf32> to vector<1x32xf32>
    %6 = vector.extract_strided_slice %1 {offsets = [1, 0], sizes = [1, 32], strides = [1, 1]} : vector<6x32xf32> to vector<1x32xf32>
    %7 = vector.extract_strided_slice %1 {offsets = [2, 0], sizes = [1, 32], strides = [1, 1]} : vector<6x32xf32> to vector<1x32xf32>
    %8 = vector.extract_strided_slice %1 {offsets = [3, 0], sizes = [1, 32], strides = [1, 1]} : vector<6x32xf32> to vector<1x32xf32>
    %9 = vector.extract_strided_slice %1 {offsets = [4, 0], sizes = [1, 32], strides = [1, 1]} : vector<6x32xf32> to vector<1x32xf32>
    %10 = vector.extract_strided_slice %1 {offsets = [5, 0], sizes = [1, 1], strides = [1, 1]} : vector<6x32xf32> to vector<1x1xf32>
    %c0_3 = arith.constant 0 : index
    %c0_4 = arith.constant 0 : index
    %11 = vector.load %arg1[%c0_3, %c0_4] : memref<8x16xf32, #tpu.memory_space<vmem>>, vector<8x16xf32>
    %c0_5 = arith.constant 0 : index
    %c0_6 = arith.constant 0 : index
    %12 = vector.load %arg2[%c0_5, %c0_6] : memref<8x8xf32, #tpu.memory_space<vmem>>, vector<8x8xf32>
    %13 = tpu.concatenate %11, %12 in 1 : vector<8x16xf32>, vector<8x8xf32> -> vector<8x24xf32>
    %c0_7 = arith.constant 0 : index
    %c0_8 = arith.constant 0 : index
    %14 = vector.load %arg3[%c0_7, %c0_8] : memref<24x160xf32, #tpu.memory_space<vmem>>, vector<24x160xf32>
    %cst = arith.constant dense<0.000000e+00> : vector<8x160xf32>
    %15 = tpu.matmul %13, %14, %cst {dimension_numbers = #tpu.dot_dimension_numbers<[1], [0], [0], [1], [0, 0, 1, 1], [], []>} : vector<8x24xf32>, vector<24x160xf32>, vector<8x160xf32> -> vector<8x160xf32>
    %16 = vector.extract_strided_slice %15 {offsets = [0, 0], sizes = [8, 64], strides = [1, 1]} : vector<8x160xf32> to vector<8x64xf32>
    %17 = vector.broadcast %2 : vector<1x64xf32> to vector<8x64xf32>
    %18 = arith.addf %16, %17 : vector<8x64xf32>
    %19 = vector.extract_strided_slice %15 {offsets = [0, 128], sizes = [8, 32], strides = [1, 1]} : vector<8x160xf32> to vector<8x32xf32>
    %20 = vector.broadcast %8 : vector<1x32xf32> to vector<8x32xf32>
    %21 = arith.addf %19, %20 : vector<8x32xf32>
    %cst_9 = arith.constant dense<0.000000e+00> : vector<8xf32>
    %22 = vector.multi_reduction <add>, %18, %cst_9 [1] : vector<8x64xf32> to vector<8xf32>
    %23 = vector.shape_cast %22 : vector<8xf32> to vector<8x1xf32>
    %cst_10 = arith.constant 6.400000e+01 : f32
    %24 = vector.broadcast %cst_10 : f32 to vector<8x1xf32>
    %25 = arith.divf %23, %24 : vector<8x1xf32>
    %26 = arith.mulf %18, %18 : vector<8x64xf32>
    %cst_11 = arith.constant dense<0.000000e+00> : vector<8xf32>
    %27 = vector.multi_reduction <add>, %26, %cst_11 [1] : vector<8x64xf32> to vector<8xf32>
    %28 = vector.shape_cast %27 : vector<8xf32> to vector<8x1xf32>
    %cst_12 = arith.constant 6.400000e+01 : f32
    %29 = vector.broadcast %cst_12 : f32 to vector<8x1xf32>
    %30 = arith.divf %28, %29 : vector<8x1xf32>
    %31 = arith.mulf %25, %25 : vector<8x1xf32>
    %32 = arith.subf %30, %31 : vector<8x1xf32>
    %cst_13 = arith.constant 0.000000e+00 : f32
    %33 = vector.broadcast %cst_13 : f32 to vector<8x1xf32>
    %34 = arith.maximumf %32, %33 : vector<8x1xf32>
    %cst_14 = arith.constant 9.99999974E-6 : f32
    %35 = vector.broadcast %cst_14 : f32 to vector<8x1xf32>
    %36 = arith.addf %34, %35 : vector<8x1xf32>
    %37 = math.rsqrt %36 : vector<8x1xf32>
    %38 = vector.broadcast %25 : vector<8x1xf32> to vector<8x64xf32>
    %39 = arith.subf %18, %38 : vector<8x64xf32>
    %40 = vector.broadcast %37 : vector<8x1xf32> to vector<8x64xf32>
    %41 = arith.mulf %39, %40 : vector<8x64xf32>
    %42 = vector.broadcast %3 : vector<1x64xf32> to vector<8x64xf32>
    %43 = arith.mulf %41, %42 : vector<8x64xf32>
    %44 = vector.broadcast %4 : vector<1x64xf32> to vector<8x64xf32>
    %45 = arith.addf %43, %44 : vector<8x64xf32>
    %cst_15 = arith.constant 0.000000e+00 : f32
    %46 = vector.broadcast %cst_15 : f32 to vector<8x64xf32>
    %47 = arith.maximumf %45, %46 : vector<8x64xf32>
    %c0_16 = arith.constant 0 : index
    %c0_17 = arith.constant 0 : index
    %48 = vector.load %arg4[%c0_16, %c0_17] : memref<64x32xf32, #tpu.memory_space<vmem>>, vector<64x32xf32>
    %cst_18 = arith.constant dense<0.000000e+00> : vector<8x32xf32>
    %49 = tpu.matmul %47, %48, %cst_18 {dimension_numbers = #tpu.dot_dimension_numbers<[1], [0], [0], [1], [0, 0, 1, 1], [], []>} : vector<8x64xf32>, vector<64x32xf32>, vector<8x32xf32> -> vector<8x32xf32>
    %50 = vector.broadcast %5 : vector<1x32xf32> to vector<8x32xf32>
    %51 = arith.addf %49, %50 : vector<8x32xf32>
    %cst_19 = arith.constant dense<0.000000e+00> : vector<8xf32>
    %52 = vector.multi_reduction <add>, %51, %cst_19 [1] : vector<8x32xf32> to vector<8xf32>
    %53 = vector.shape_cast %52 : vector<8xf32> to vector<8x1xf32>
    %cst_20 = arith.constant 3.200000e+01 : f32
    %54 = vector.broadcast %cst_20 : f32 to vector<8x1xf32>
    %55 = arith.divf %53, %54 : vector<8x1xf32>
    %56 = arith.mulf %51, %51 : vector<8x32xf32>
    %cst_21 = arith.constant dense<0.000000e+00> : vector<8xf32>
    %57 = vector.multi_reduction <add>, %56, %cst_21 [1] : vector<8x32xf32> to vector<8xf32>
    %58 = vector.shape_cast %57 : vector<8xf32> to vector<8x1xf32>
    %cst_22 = arith.constant 3.200000e+01 : f32
    %59 = vector.broadcast %cst_22 : f32 to vector<8x1xf32>
    %60 = arith.divf %58, %59 : vector<8x1xf32>
    %61 = arith.mulf %55, %55 : vector<8x1xf32>
    %62 = arith.subf %60, %61 : vector<8x1xf32>
    %cst_23 = arith.constant 0.000000e+00 : f32
    %63 = vector.broadcast %cst_23 : f32 to vector<8x1xf32>
    %64 = arith.maximumf %62, %63 : vector<8x1xf32>
    %cst_24 = arith.constant 9.99999974E-6 : f32
    %65 = vector.broadcast %cst_24 : f32 to vector<8x1xf32>
    %66 = arith.addf %64, %65 : vector<8x1xf32>
    %67 = math.rsqrt %66 : vector<8x1xf32>
    %68 = vector.broadcast %55 : vector<8x1xf32> to vector<8x32xf32>
    %69 = arith.subf %51, %68 : vector<8x32xf32>
    %70 = vector.broadcast %67 : vector<8x1xf32> to vector<8x32xf32>
    %71 = arith.mulf %69, %70 : vector<8x32xf32>
    %72 = vector.broadcast %6 : vector<1x32xf32> to vector<8x32xf32>
    %73 = arith.mulf %71, %72 : vector<8x32xf32>
    %74 = vector.broadcast %7 : vector<1x32xf32> to vector<8x32xf32>
    %75 = arith.addf %73, %74 : vector<8x32xf32>
    %76 = arith.addf %75, %21 : vector<8x32xf32>
    %cst_25 = arith.constant 0.000000e+00 : f32
    %77 = vector.broadcast %cst_25 : f32 to vector<8x32xf32>
    %78 = arith.maximumf %76, %77 : vector<8x32xf32>
    %79 = vector.broadcast %9 : vector<1x32xf32> to vector<8x32xf32>
    %80 = arith.mulf %78, %79 : vector<8x32xf32>
    %cst_26 = arith.constant dense<0.000000e+00> : vector<8xf32>
    %81 = vector.multi_reduction <add>, %80, %cst_26 [1] : vector<8x32xf32> to vector<8xf32>
    %82 = vector.shape_cast %81 : vector<8xf32> to vector<8x1xf32>
    %83 = vector.broadcast %10 : vector<1x1xf32> to vector<8x1xf32>
    %84 = arith.addf %82, %83 : vector<8x1xf32>
    %85 = tpu.transpose %84, [1, 0] : vector<8x1xf32> -> vector<1x8xf32>
    %c0_27 = arith.constant 0 : index
    %c0_28 = arith.constant 0 : index
    %86 = vector.load %arg7[%c0_27, %c0_28] : memref<1x8xf32, #tpu.memory_space<vmem>>, vector<1x8xf32>
    tpu.vector_store %arg7[%c0_27, %c0_28], %85 {strides = array<i32>} : memref<1x8xf32, #tpu.memory_space<vmem>>, vector<1x8xf32>,
    return
  }
  func.func @transform_0(%arg0: i32) -> (i32, i32) {
    %c0_i32 = arith.constant 0 : i32
    %c0_i32_0 = arith.constant 0 : i32
    return %arg0, %c0_i32 : i32, i32
  }
  func.func @transform_1(%arg0: i32) -> (i32, i32) {
    %c0_i32 = arith.constant 0 : i32
    %c0_i32_0 = arith.constant 0 : i32
    return %arg0, %c0_i32 : i32, i32
  }
  func.func @transform_2(%arg0: i32) -> (i32, i32) {
    %c0_i32 = arith.constant 0 : i32
    %c0_i32_0 = arith.constant 0 : i32
    %c0_i32_1 = arith.constant 0 : i32
    return %c0_i32, %c0_i32_0 : i32, i32
  }
  func.func @transform_3(%arg0: i32) -> (i32, i32) {
    %c0_i32 = arith.constant 0 : i32
    %c0_i32_0 = arith.constant 0 : i32
    %c0_i32_1 = arith.constant 0 : i32
    return %c0_i32, %c0_i32_0 : i32, i32
  }
  func.func @transform_4(%arg0: i32) -> (i32, i32) {
    %c0_i32 = arith.constant 0 : i32
    %c0_i32_0 = arith.constant 0 : i32
    %c0_i32_1 = arith.constant 0 : i32
    return %c0_i32, %c0_i32_0 : i32, i32
  }
  func.func @transform_5(%arg0: i32) -> (i32, i32) {
    %c0_i32 = arith.constant 0 : i32
    %c0_i32_0 = arith.constant 0 : i32
    %c0_i32_1 = arith.constant 0 : i32
    return %c0_i32, %c0_i32_0 : i32, i32
  }
  func.func @transform_6(%arg0: i32) -> (i32, i32) {
    %c0_i32 = arith.constant 0 : i32
    %c0_i32_0 = arith.constant 0 : i32
    return %c0_i32, %arg0 : i32, i32
  }
}

</mosaic_0001>

<llo_original>
// kernel: tpu_custom_call.1
$region0: #{tpu_custom_call.1}
  #allocation0 [shape = 'u32[]', space=smem, size = 0x4, offset = 0x4, fixed_abs, tag = 'smem constant byte address 0x4 - core index']
  #allocation1 [shape = 'u32[144,128]{1,0:T(1,128)}', space=vmem, size = 0x12000, scoped, tag = 'internal scratch']
  %s0 = inlined_call_operand.vmem [shape: f32[8,16], index: 0, kind: input, shape index: {}]
  %s1 = inlined_call_operand.vmem [shape: f32[8,8], index: 1, kind: input, shape index: {}]
  %s2 = inlined_call_operand.vmem [shape: f32[24,160], index: 2, kind: input, shape index: {}]
  %s3 = inlined_call_operand.vmem [shape: f32[64,32], index: 3, kind: input, shape index: {}]
  %s4 = inlined_call_operand.vmem [shape: f32[3,64], index: 4, kind: input, shape index: {}]
  %s5 = inlined_call_operand.vmem [shape: f32[6,32], index: 5, kind: input, shape index: {}]
  %s6 = inlined_call_operand.hbm [shape: f32[1,8], index: 6, kind: output, shape index: {}]
  %s7 = sld [smem:[#allocation0]]
  $region34: #{tpu_custom_call.1} parent=0
    _
  %s9 = ssub.s32 1, %s7
  %s10 = scalar_select 0, %s9, %s7
  $region1: #{tpu_custom_call.1} parent=0
    #allocation2 [shape = 'u8[512]{0}', space=vmem, size = 0x400, scoped, tag = 'output window, operand 0, single buffered']
    #allocation3 [shape = 's32[1]{0}', space=sflag, size = 0x4, scoped, tag = 'scoped memory for tpu_custom_call.1']
    %11 = vsyncpa [#allocation3], 0
    // Predicated region
    $region2: #{tpu_custom_call.1} parent=1 // pred_check
      _
    $region3: #{tpu_custom_call.1} parent=1 // pred_check_branch
      %13 = sbr.rel (0) target = $region5
    $region4: #{tpu_custom_call.1} parent=1 // pred_region
      _
    $region5: #{tpu_custom_call.1} parent=1 // pred_fallthru
      _
    // Predicated region
    $region6: #{tpu_custom_call.1} parent=1 // pred_check
      _
    $region7: #{tpu_custom_call.1} parent=1 // pred_check_branch
      %15 = sbr.rel (0) target = $region9
    $region8: #{tpu_custom_call.1} parent=1 // pred_region
      _
    $region9: #{tpu_custom_call.1} parent=1 // pred_fallthru
      _
    // Predicated region
    $region10: #{tpu_custom_call.1} parent=1 // pred_check
      _
    $region11: #{tpu_custom_call.1} parent=1 // pred_check_branch
      %17 = sbr.rel (0) target = $region13
    $region12: #{tpu_custom_call.1} parent=1 // pred_region
      _
    $region13: #{tpu_custom_call.1} parent=1 // pred_fallthru
      _
    // Predicated region
    $region14: #{tpu_custom_call.1} parent=1 // pred_check
      _
    $region15: #{tpu_custom_call.1} parent=1 // pred_check_branch
      %19 = sbr.rel (0) target = $region17
    $region16: #{tpu_custom_call.1} parent=1 // pred_region
      _
    $region17: #{tpu_custom_call.1} parent=1 // pred_fallthru
      _
    // Predicated region
    $region18: #{tpu_custom_call.1} parent=1 // pred_check
      _
    $region19: #{tpu_custom_call.1} parent=1 // pred_check_branch
      %21 = sbr.rel (0) target = $region21
    $region20: #{tpu_custom_call.1} parent=1 // pred_region
      _
    $region21: #{tpu_custom_call.1} parent=1 // pred_fallthru
      _
    // Predicated region
    $region22: #{tpu_custom_call.1} parent=1 // pred_check
      _
    $region23: #{tpu_custom_call.1} parent=1 // pred_check_branch
      %23 = sbr.rel (0) target = $region25
    $region24: #{tpu_custom_call.1} parent=1 // pred_region
      _
    $region25: #{tpu_custom_call.1} parent=1 // pred_fallthru
      _
    %v24 = vld [vmem:[%s4] sm:$0x7]
    %v25 = vld [vmem:[%s5] sm:$0x3f]
    %v26 = vld [vmem:[%s0] sm:$0xff]
    %v27 = vld [vmem:[%s1] sm:$0xff]
    %29 = vrot.lane.b32.xlu0 %v27, 16
    %v30 = vpop.permute.xlu0 %29
    %vm32 = vcmask 130048
    %v33 = vsel %vm32, %v26, %v30
    %v34 = vld [vmem:[%s2] sm:$0xff]
    %v35 = vld [vmem:[%s2 + $0x8] sm:$0xff]
    %v36 = vld [vmem:[%s2 + $0x10] sm:$0xff]
    %v37 = vld [vmem:[%s2 + $0x18] sm:$0xff]
    %v38 = vld [vmem:[%s2 + $0x20] sm:$0xff]
    %v39 = vld [vmem:[%s2 + $0x28] sm:$0xff]
    %vm40 = vcmask 195584
    %v42 = vsel %vm40, %v33, 0
    %44 = vmatprep.subr.mxu0 %v35
    %45 = vmatpush1.msra.mxu0 %v34
    %46 = vmatprep.subr.mxu0 %v37
    %47 = vmatpush1.msra.mxu0 %v36
    %48 = vmatprep.subr.mxu0 %v39
    %49 = vmatpush1.msra.mxu0 %v38
    %50 = vmatprep.subr.mxu0 0.0
    %51 = vmatpush1.msra.mxu0 0.0
    %52 = vmatprep.subr.mxu0 0.0
    %53 = vmatpush1.msra.mxu0 0.0
    %54 = vmatprep.subr.mxu0 0.0
    %55 = vmatpush1.msra.mxu0 0.0
    %56 = vmatprep.subr.mxu0 0.0
    %57 = vmatpush1.msra.mxu0 0.0
    %58 = vmatprep.subr.mxu0 0.0
    %59 = vmatpush1.msra.mxu0 0.0
    %60 = vmatprep.subr.mxu0 0.0
    %61 = vmatpush1.msra.mxu0 0.0
    %62 = vmatprep.subr.mxu0 0.0
    %63 = vmatpush1.msra.mxu0 0.0
    %64 = vmatprep.subr.mxu0 0.0
    %65 = vmatpush1.msra.mxu0 0.0
    %66 = vmatprep.subr.mxu0 0.0
    %67 = vmatpush1.msra.mxu0 0.0
    %68 = vmatprep.subr.mxu0 0.0
    %69 = vmatpush1.msra.mxu0 0.0
    %70 = vmatprep.subr.mxu0 0.0
    %71 = vmatpush1.msra.mxu0 0.0
    %72 = vmatprep.subr.mxu0 0.0
    %73 = vmatpush1.msra.mxu0 0.0
    %74 = vmatprep.subr.mxu0 0.0
    %75 = vmatpush1.msra.mxu0 0.0
    %76 = vmatprep.subr.mxu0 0.0
    %77 = vmatpush1.msra.mxu0 0.0
    %78 = vmatprep.subr.mxu0 0.0
    %79 = vmatpush1.msra.mxu0 0.0
    %80 = vmatprep.subr.mxu0 0.0
    %81 = vmatpush1.msra.mxu0 0.0
    %82 = vmatprep.subr.mxu0 0.0
    %83 = vmatpush1.msra.mxu0 0.0
    %84 = vmatprep.subr.mxu0 0.0
    %85 = vmatpush1.msra.mxu0 0.0
    %86 = vmatprep.subr.mxu0 0.0
    %87 = vmatpush1.msra.mxu0 0.0
    %88 = vmatprep.subr.mxu0 0.0
    %89 = vmatpush1.msra.mxu0 0.0
    %90 = vmatprep.subr.mxu0 0.0
    %91 = vmatpush1.msra.mxu0 0.0
    %92 = vmatprep.subr.mxu0 0.0
    %93 = vmatpush1.msra.mxu0 0.0
    %94 = vmatprep.subr.mxu0 0.0
    %95 = vmatpush1.msra.mxu0 0.0
    %96 = vmatprep.subr.mxu0 0.0
    %97 = vmatpush1.msra.mxu0 0.0
    %98 = vmatprep.subr.mxu0 0.0
    %99 = vmatpush1.msra.mxu0 0.0
    %100 = vmatprep.subr.mxu0 0.0
    %101 = vmatpush1.msra.mxu0 0.0
    %102 = vmatprep.subr.mxu0 0.0
    %103 = vmatpush1.msra.mxu0 0.0
    %104 = vmatprep.subr.mxu0 0.0
    %105 = vmatpush1.msra.mxu0 0.0
    %106 = vmatprep.subr.mxu0 0.0
    %107 = vmatpush1.msra.mxu0 0.0
    %108 = vmatprep.mubr.f32.mxu0 0.0
    %109 = vmatmul.mubr.f32.gmra.mrb[0].mxu0 %v42
    %v110 = vpop.f32.mrb[0].mxu0
    %v111 = vadd.f32 0.0, %v110
    %v112 = vpop.f32.mrb[0].mxu0
    %v113 = vadd.f32 0.0, %v112
    %114 = vdwg.mxu0
    %v115 = vlaneseq
    %v116 = vshrl.u32 %v115, 7
    %v117 = vsub.s32 0, %v116
    %v118 = vrot.slane %v24, %v117
    %v119 = vadd.f32 %v111, %v118
    %v120 = vlaneseq
    %v121 = vshrl.u32 %v120, 7
    %v122 = vsub.s32 3, %v121
    %v123 = vrot.slane %v25, %v122
    %v124 = vadd.f32 %v113, %v123
    %vm125 = vcmask 523264
    %v126 = vsel %vm125, %v119, 0.0
    %127 = vadd.xlane.f32.xlu0 %v126
    %v128 = vpop.xlane.xlu0 %127
    %v129 = vrcp.pop 64.0
    %v130 = vmul.f32 %v128, %v129
    %v131 = vmul.f32 %v119, %v119
    %v132 = vsel %vm125, %v131, 0.0
    %133 = vadd.xlane.f32.xlu0 %v132
    %v134 = vpop.xlane.xlu0 %133
    %v135 = vmul.f32 %v134, %v129
    %v136 = vmul.f32 %v130, %v130
    %v137 = vsub.f32 %v135, %v136
    %v138 = vmax.f32 %v137, 0.0
    %v139 = vadd.f32 %v138, 1e-05
    %v140 = vrsqrt.pop %v139
    %v141 = vsub.f32 %v119, %v130
    %v142 = vmul.f32 %v141, %v140
    %v143 = vlaneseq
    %v144 = vshrl.u32 %v143, 7
    %v145 = vsub.s32 1, %v144
    %v146 = vrot.slane %v24, %v145
    %v147 = vmul.f32 %v142, %v146
    %v148 = vlaneseq
    %v149 = vshrl.u32 %v148, 7
    %v150 = vsub.s32 2, %v149
    %v151 = vrot.slane %v24, %v150
    %v152 = vadd.f32 %v147, %v151
    %v153 = vmax.f32 %v152, 0.0
    %v154 = vld [vmem:[%s3] sm:$0xff]
    %v155 = vld [vmem:[%s3 + $0x8] sm:$0xff]
    %v156 = vld [vmem:[%s3 + $0x10] sm:$0xff]
    %v157 = vld [vmem:[%s3 + $0x18] sm:$0xff]
    %v158 = vld [vmem:[%s3 + $0x20] sm:$0xff]
    %v159 = vld [vmem:[%s3 + $0x28] sm:$0xff]
    %v160 = vld [vmem:[%s3 + $0x30] sm:$0xff]
    %v161 = vld [vmem:[%s3 + $0x38] sm:$0xff]
    %v162 = vlaneseq
    %v163 = vshrl.u32 %v162, 7
    %v164 = vsub.s32 0, %v163
    %v165 = vrot.slane %v25, %v164
    %v167 = vsel %vm125, %v153, 0
    %169 = vmatprep.subr.mxu0 0.0
    %170 = vmatpush1.msra.mxu0 %v154
    %171 = vmatprep.subr.mxu0 0.0
    %172 = vmatpush1.msra.mxu0 %v155
    %173 = vmatprep.subr.mxu0 0.0
    %174 = vmatpush1.msra.mxu0 %v156
    %175 = vmatprep.subr.mxu0 0.0
    %176 = vmatpush1.msra.mxu0 %v157
    %177 = vmatprep.subr.mxu0 0.0
    %178 = vmatpush1.msra.mxu0 %v158
    %179 = vmatprep.subr.mxu0 0.0
    %180 = vmatpush1.msra.mxu0 %v159
    %181 = vmatprep.subr.mxu0 0.0
    %182 = vmatpush1.msra.mxu0 %v160
    %183 = vmatprep.subr.mxu0 0.0
    %184 = vmatpush1.msra.mxu0 %v161
    %185 = vmatprep.subr.mxu0 0.0
    %186 = vmatpush1.msra.mxu0 0.0
    %187 = vmatprep.subr.mxu0 0.0
    %188 = vmatpush1.msra.mxu0 0.0
    %189 = vmatprep.subr.mxu0 0.0
    %190 = vmatpush1.msra.mxu0 0.0
    %191 = vmatprep.subr.mxu0 0.0
    %192 = vmatpush1.msra.mxu0 0.0
    %193 = vmatprep.subr.mxu0 0.0
    %194 = vmatpush1.msra.mxu0 0.0
    %195 = vmatprep.subr.mxu0 0.0
    %196 = vmatpush1.msra.mxu0 0.0
    %197 = vmatprep.subr.mxu0 0.0
    %198 = vmatpush1.msra.mxu0 0.0
    %199 = vmatprep.subr.mxu0 0.0
    %200 = vmatpush1.msra.mxu0 0.0
    %201 = vmatprep.subr.mxu0 0.0
    %202 = vmatpush1.msra.mxu0 0.0
    %203 = vmatprep.subr.mxu0 0.0
    %204 = vmatpush1.msra.mxu0 0.0
    %205 = vmatprep.subr.mxu0 0.0
    %206 = vmatpush1.msra.mxu0 0.0
    %207 = vmatprep.subr.mxu0 0.0
    %208 = vmatpush1.msra.mxu0 0.0
    %209 = vmatprep.subr.mxu0 0.0
    %210 = vmatpush1.msra.mxu0 0.0
    %211 = vmatprep.subr.mxu0 0.0
    %212 = vmatpush1.msra.mxu0 0.0
    %213 = vmatprep.subr.mxu0 0.0
    %214 = vmatpush1.msra.mxu0 0.0
    %215 = vmatprep.subr.mxu0 0.0
    %216 = vmatpush1.msra.mxu0 0.0
    %217 = vmatprep.subr.mxu0 0.0
    %218 = vmatpush1.msra.mxu0 0.0
    %219 = vmatprep.subr.mxu0 0.0
    %220 = vmatpush1.msra.mxu0 0.0
    %221 = vmatprep.subr.mxu0 0.0
    %222 = vmatpush1.msra.mxu0 0.0
    %223 = vmatprep.subr.mxu0 0.0
    %224 = vmatpush1.msra.mxu0 0.0
    %225 = vmatprep.subr.mxu0 0.0
    %226 = vmatpush1.msra.mxu0 0.0
    %227 = vmatprep.subr.mxu0 0.0
    %228 = vmatpush1.msra.mxu0 0.0
    %229 = vmatprep.subr.mxu0 0.0
    %230 = vmatpush1.msra.mxu0 0.0
    %231 = vmatprep.subr.mxu0 0.0
    %232 = vmatpush1.msra.mxu0 0.0
    %233 = vmatprep.mubr.f32.mxu0 0.0
    %234 = vmatmul.mubr.f32.gmra.mrb[0].mxu0 %v167
    %v235 = vpop.f32.mrb[0].mxu0
    %v236 = vadd.f32 %v165, %v235
    %v237 = vpop.f32.mrb[0].mxu0
    %238 = vdwg.mxu0
    %vm239 = vcmask 261120
    %v240 = vsel %vm239, %v236, 0.0
    %241 = vadd.xlane.f32.xlu0 %v240
    %v242 = vpop.xlane.xlu0 %241
    %v243 = vrcp.pop 32.0
    %v244 = vmul.f32 %v242, %v243
    %v245 = vmul.f32 %v236, %v236
    %v246 = vsel %vm239, %v245, 0.0
    %247 = vadd.xlane.f32.xlu0 %v246
    %v248 = vpop.xlane.xlu0 %247
    %v249 = vmul.f32 %v248, %v243
    %v250 = vmul.f32 %v244, %v244
    %v251 = vsub.f32 %v249, %v250
    %v252 = vmax.f32 %v251, 0.0
    %v253 = vadd.f32 %v252, 1e-05
    %v254 = vrsqrt.pop %v253
    %v255 = vsub.f32 %v236, %v244
    %v256 = vmul.f32 %v255, %v254
    %v257 = vlaneseq
    %v258 = vshrl.u32 %v257, 7
    %v259 = vsub.s32 1, %v258
    %v260 = vrot.slane %v25, %v259
    %v261 = vmul.f32 %v256, %v260
    %v262 = vlaneseq
    %v263 = vshrl.u32 %v262, 7
    %v264 = vsub.s32 2, %v263
    %v265 = vrot.slane %v25, %v264
    %v266 = vadd.f32 %v261, %v265
    %v267 = vadd.f32 %v266, %v124
    %v268 = vmax.f32 %v267, 0.0
    %v269 = vlaneseq
    %v270 = vshrl.u32 %v269, 7
    %v271 = vsub.s32 4, %v270
    %v272 = vrot.slane %v25, %v271
    %v273 = vmul.f32 %v268, %v272
    %v274 = vsel %vm239, %v273, 0.0
    %275 = vadd.xlane.f32.xlu0 %v274
    %v276 = vpop.xlane.xlu0 %275
    %v277 = vlaneseq
    %v278 = vshrl.u32 %v277, 7
    %v279 = vsub.s32 5, %v278
    %v280 = vrot.slane %v25, %v279
    %v281 = vadd.f32 %v276, %v280
    %282 = vxpose.xlu0.b32.start [1/16] %v281, 128
    %283 = vxpose.xlu0.b32.cont [2/16] 0.0, 128
    %284 = vxpose.xlu0.b32.cont [3/16] 0.0, 128
    %285 = vxpose.xlu0.b32.cont [4/16] 0.0, 128
    %286 = vxpose.xlu0.b32.cont [5/16] 0.0, 128
    %287 = vxpose.xlu0.b32.cont [6/16] 0.0, 128
    %288 = vxpose.xlu0.b32.cont [7/16] 0.0, 128
    %289 = vxpose.xlu0.b32.cont [8/16] 0.0, 128
    %290 = vxpose.xlu0.b32.cont [9/16] 0.0, 128
    %291 = vxpose.xlu0.b32.cont [10/16] 0.0, 128
    %292 = vxpose.xlu0.b32.cont [11/16] 0.0, 128
    %293 = vxpose.xlu0.b32.cont [12/16] 0.0, 128
    %294 = vxpose.xlu0.b32.cont [13/16] 0.0, 128
    %295 = vxpose.xlu0.b32.cont [14/16] 0.0, 128
    %296 = vxpose.xlu0.b32.cont [15/16] 0.0, 128
    %297 = vxpose.xlu0.b32.end [16/16] 0.0, 128
    %v298 = vpop.trf.xlu0
    %v299 = vpop.trf.xlu0
    %v300 = vpop.trf.xlu0
    %v301 = vpop.trf.xlu0
    %v302 = vpop.trf.xlu0
    %v303 = vpop.trf.xlu0
    %v304 = vpop.trf.xlu0
    %v305 = vpop.trf.xlu0
    %v306 = vpop.trf.xlu0
    %v307 = vpop.trf.xlu0
    %v308 = vpop.trf.xlu0
    %v309 = vpop.trf.xlu0
    %v310 = vpop.trf.xlu0
    %v311 = vpop.trf.xlu0
    %v312 = vpop.trf.xlu0
    %v313 = vpop.trf.xlu0
    %vm314 = vcmask 57344
    %315 = vst.msk [vmem:[#allocation2] sm:$0x1] %vm314, %v298
    // Predicated region
    $region26: #{tpu_custom_call.1} parent=1 // pred_check
      _
    $region27: #{tpu_custom_call.1} parent=1 // pred_check_branch
      %317 = sbr.rel (0) target = $region29
    $region28: #{tpu_custom_call.1} parent=1 // pred_region
      %s319 = ssub.s32 16, 16
      %320 = vsyncadd [#allocation3], %s319
      %s322 = sshll.u32 [#allocation2], 4
      %s323 = int_to_ptr.vmem [resolvable:$true] %s322
      %325 = dma.vmem_to_hbm [thread:$0]  %s323, 16, %s6, [#allocation3]
    $region29: #{tpu_custom_call.1} parent=1 // pred_fallthru
      _
    // Predicated region
    $region30: #{tpu_custom_call.1} parent=1 // pred_check
      _
    $region31: #{tpu_custom_call.1} parent=1 // pred_check_branch
      %327 = sbr.rel (0) target = $region33
    $region32: #{tpu_custom_call.1} parent=1 // pred_region
      %328 = dma.done [#allocation3], 16
    $region33: #{tpu_custom_call.1} parent=1 // pred_fallthru
      _
    %329 = vsyncpa [#allocation3], 1

</llo_original>
